<compile_context>
chip_gen: v7x
topology: tpu7x:2x2x1
jax: 0.10.0
libtpu: 0.0.40
codegen_flags: <defaults>
</compile_context>

<pallas_src>
import functools

import jax
import jax.numpy as jnp
from jax.experimental import pallas as pl
from jax.experimental.pallas import tpu as pltpu


# ----------------------------- small helpers --------------------------------

def _round_up(x, m):
    return (x + m - 1) // m * m


def _row_tile(n):
    """Largest aligned row tile that still leaves >=2 grid steps (v7x: 2 TCs)."""
    for t in (512, 256, 128, 64, 32, 16, 8):
        if n % t == 0 and n // t >= 2:
            return t
    return n


def _leaky_relu(x, slope):
    return jnp.where(x > 0, x, slope * x)


def _elu(x):
    return jnp.where(x > 0, x, jnp.exp(jnp.minimum(x, 0.0)) - 1.0)


# ------------------------------- kernels ------------------------------------

def gat_proj_kernel(x_ref, w_ref, al_ref, ar_ref, z_ref, el_ref, er_ref):
    """Per row-tile: z = x @ W ; el = z @ A_L ; er = z @ A_R (all MXU, f32)."""
    x = x_ref[...]
    z = jnp.dot(x, w_ref[...], preferred_element_type=jnp.float32)
    z_ref[...] = z
    el_ref[...] = jnp.dot(z, al_ref[...], preferred_element_type=jnp.float32)
    er_ref[...] = jnp.dot(z, ar_ref[...], preferred_element_type=jnp.float32)


def gat_attn_kernel(er_ref, elt_ref, adj_ref, z_ref, b_ref, out_ref, *,
                    num_heads, head_dp, negative_slope, reduce_mode):
    """Per destination-row tile: masked edge softmax + neighborhood aggregation.

    er_ref : (tv, 128)   column h = <a_r, z_dst> for head h (dest tile rows)
    elt_ref: (H,  N)     row h    = <a_l, z_src> for head h (all source nodes)
    adj_ref: (tv, N)     adj[v,u] = 1.0 iff edge u -> v (includes self loops)
    z_ref  : (N, H*Dp)   projected source features, head-blocked, lane padded
    b_ref  : (1, H*Dp)   per-head bias, lane padded
    """
    adj = adj_ref[...]
    er = er_ref[...]
    elt = elt_ref[...]

    acc = None
    for h in range(num_heads):                               # few heads: unroll
        e = er[:, h:h + 1] + elt[h:h + 1, :]                 # (tv, N)
        e = _leaky_relu(e, negative_slope)
        e = jnp.where(adj > 0, e, jnp.float32(-1e9))         # mask non-edges
        e = e - jnp.max(e, axis=-1, keepdims=True)
        p = jnp.exp(e)
        alpha = p / jnp.sum(p, axis=-1, keepdims=True)       # edge softmax
        z_h = z_ref[:, h * head_dp:(h + 1) * head_dp]        # (N, Dp)
        out_h = jnp.dot(alpha, z_h, preferred_element_type=jnp.float32)
        out_h = out_h + b_ref[:, h * head_dp:(h + 1) * head_dp]
        if reduce_mode == "flatten":                         # hidden layer
            out_ref[:, h * head_dp:(h + 1) * head_dp] = _elu(out_h)
        else:                                                # output layer mean
            acc = out_h if acc is None else acc + out_h
    if reduce_mode == "mean":
        out_ref[...] = acc * jnp.float32(1.0 / num_heads)


# --------------------------- per-layer wrapper -------------------------------

def gat_conv(h_pad, adj_pad, padded_params, *, num_heads, head_dp,
             negative_slope, reduce_mode, row_tile, vmem_limit):
    w_p, al_p, ar_p, b_p = padded_params
    n_pad, fin_p = h_pad.shape
    hdp = num_heads * head_dp
    grid = (n_pad // row_tile,)
    cparams = pltpu.CompilerParams(dimension_semantics=("parallel",),
                                   vmem_limit_bytes=vmem_limit)

    # ---- projection: z, el, er (lane-dense f32 outputs) ----
    z, el, er = pl.pallas_call(
        gat_proj_kernel,
        out_shape=(jax.ShapeDtypeStruct((n_pad, hdp), jnp.float32),
                   jax.ShapeDtypeStruct((n_pad, 128), jnp.float32),
                   jax.ShapeDtypeStruct((n_pad, 128), jnp.float32)),
        grid_spec=pltpu.PrefetchScalarGridSpec(
            num_scalar_prefetch=0,
            grid=grid,
            in_specs=[
                pl.BlockSpec((row_tile, fin_p), lambda i: (i, 0)),
                pl.BlockSpec((fin_p, hdp), lambda i: (0, 0)),   # constant index:
                pl.BlockSpec((hdp, 128), lambda i: (0, 0)),     #  fetched once,
                pl.BlockSpec((hdp, 128), lambda i: (0, 0)),     #  no re-DMA
            ],
            out_specs=[
                pl.BlockSpec((row_tile, hdp), lambda i: (i, 0)),
                pl.BlockSpec((row_tile, 128), lambda i: (i, 0)),
                pl.BlockSpec((row_tile, 128), lambda i: (i, 0)),
            ]),
        compiler_params=cparams,
    )(h_pad, w_p, al_p, ar_p)

    # tiny glue: source-side attention logits head-major, so the attention
    # kernel broadcasts them along lanes without any in-kernel transpose.
    el_t = jnp.transpose(el[:, :num_heads])                  # (H, N_pad)

    out_cols = hdp if reduce_mode == "flatten" else head_dp
    kern = functools.partial(gat_attn_kernel, num_heads=num_heads,
                             head_dp=head_dp, negative_slope=negative_slope,
                             reduce_mode=reduce_mode)
    out = pl.pallas_call(
        kern,
        out_shape=jax.ShapeDtypeStruct((n_pad, out_cols), jnp.float32),
        grid_spec=pltpu.PrefetchScalarGridSpec(
            num_scalar_prefetch=0,
            grid=grid,
            in_specs=[
                pl.BlockSpec((row_tile, 128), lambda i: (i, 0)),      # er tile
                pl.BlockSpec((num_heads, n_pad), lambda i: (0, 0)),   # el^T full
                pl.BlockSpec((row_tile, n_pad), lambda i: (i, 0)),    # adj rows
                pl.BlockSpec((n_pad, hdp), lambda i: (0, 0)),         # z full
                pl.BlockSpec((1, hdp), lambda i: (0, 0)),             # bias
            ],
            out_specs=pl.BlockSpec((row_tile, out_cols), lambda i: (i, 0))),
        compiler_params=cparams,
    )(er, el_t, adj_pad, z, b_p)
    return out


# ----------------------- weight preparation (padding) ------------------------

def pad_layer_params(w, a_l, a_r, bias, in_blocks, in_d, in_dp, out_dp):
    """Zero-pad GATConv params to the lane-dense head-blocked layout."""
    num_heads, d = a_l.shape
    dt = w.dtype
    w4 = w.reshape(in_blocks, in_d, num_heads, d)
    w_p = jnp.zeros((in_blocks, in_dp, num_heads, out_dp), dt)
    w_p = w_p.at[:, :in_d, :, :d].set(w4)
    w_p = w_p.reshape(in_blocks * in_dp, num_heads * out_dp)

    head_onehot = jnp.eye(128, dtype=dt)[:num_heads]                   # (H,128)
    al_p = jnp.zeros((num_heads, out_dp, 128), dt).at[:, :d, :].set(
        a_l[:, :, None] * head_onehot[:, None, :]).reshape(num_heads * out_dp, 128)
    ar_p = jnp.zeros((num_heads, out_dp, 128), dt).at[:, :d, :].set(
        a_r[:, :, None] * head_onehot[:, None, :]).reshape(num_heads * out_dp, 128)
    b_p = jnp.zeros((1, num_heads, out_dp), dt).at[0, :, :d].set(bias)
    b_p = b_p.reshape(1, num_heads * out_dp)
    return w_p, al_p, ar_p, b_p


# ------------------------------ full forward ---------------------------------

def gat_forward(x, adj, layer_params, heads, num_hidden, num_classes,
                negative_slope=0.2):
    """GAT forward: hidden GATConv layers (ELU, flatten) + output layer (mean)."""
    n, in_dim = x.shape
    n_pad = _round_up(max(n, 16), 16)
    row_tile = _row_tile(n_pad)
    vmem_limit = 32 * 1024 * 1024

    # pad the graph; padded nodes get only a self-loop so the masked softmax
    # stays well-defined (their rows are discarded at the end).
    adj_p = jnp.zeros((n_pad, n_pad), jnp.float32).at[:n, :n].set(adj)
    pad_ids = jnp.arange(n, n_pad)
    adj_p = adj_p.at[pad_ids, pad_ids].set(1.0)

    in_dp0 = _round_up(in_dim, 128)
    h = jnp.zeros((n_pad, in_dp0), jnp.float32).at[:n, :in_dim].set(x)

    head_dp = 128                       # per-head padded width (lane dense)
    in_blocks, in_d, in_dp = 1, in_dim, in_dp0
    num_layers = len(heads) - 1

    for l in range(num_layers):
        p = layer_params[l]
        padded = pad_layer_params(p["W"], p["a_l"], p["a_r"], p["bias"],
                                  in_blocks, in_d, in_dp, head_dp)
        h = gat_conv(h, adj_p, padded, num_heads=heads[l], head_dp=head_dp,
                     negative_slope=negative_slope, reduce_mode="flatten",
                     row_tile=row_tile, vmem_limit=vmem_limit)
        in_blocks, in_d, in_dp = heads[l], num_hidden, head_dp

    p = layer_params[num_layers]
    out_dp = _round_up(num_classes, 128)
    padded = pad_layer_params(p["W"], p["a_l"], p["a_r"], p["bias"],
                              in_blocks, in_d, in_dp, out_dp)
    out = gat_conv(h, adj_p, padded, num_heads=heads[-1], head_dp=out_dp,
                   negative_slope=negative_slope, reduce_mode="mean",
                   row_tile=row_tile, vmem_limit=vmem_limit)
    return out[:n, :num_classes]


# ------------------------- params & pure-JAX reference -----------------------

def make_gat_params(key, in_dim, num_hidden, num_classes, heads):
    num_layers = len(heads) - 1
    dims, fin = [], in_dim
    for l in range(num_layers):
        dims.append((fin, heads[l], num_hidden))
        fin = heads[l] * num_hidden
    dims.append((fin, heads[-1], num_classes))
    params = []
    for fin, nh, d in dims:
        key, kw, ka, kb, kc = jax.random.split(key, 5)
        s = 1.0 / (fin ** 0.5)
        params.append(dict(
            W=jax.random.uniform(kw, (fin, nh * d), jnp.float32, -s, s),
            a_l=jax.random.uniform(ka, (nh, d), jnp.float32, -s, s),
            a_r=jax.random.uniform(kb, (nh, d), jnp.float32, -s, s),
            bias=jax.random.uniform(kc, (nh, d), jnp.float32, -s, s),
        ))
    return params


def gat_conv_ref(h, adj, p, negative_slope, apply_act):
    hp = jax.lax.Precision.HIGHEST
    nh, d = p["a_l"].shape
    n = h.shape[0]
    z = jnp.dot(h, p["W"], precision=hp).reshape(n, nh, d)
    el = jnp.sum(z * p["a_l"][None], axis=-1)                 # (n, H)
    er = jnp.sum(z * p["a_r"][None], axis=-1)                 # (n, H)
    e = er[:, None, :] + el[None, :, :]                       # (dst, src, H)
    e = _leaky_relu(e, negative_slope)
    e = jnp.where(adj[:, :, None] > 0, e, -1e9)
    e = e - jnp.max(e, axis=1, keepdims=True)
    w = jnp.exp(e)
    alpha = w / jnp.sum(w, axis=1, keepdims=True)
    rst = jnp.einsum("vuh,uhd->vhd", alpha, z, precision=hp) + p["bias"][None]
    return _elu(rst) if apply_act else rst


def gat_ref(x, adj, layer_params, heads, num_classes, negative_slope=0.2):
    h = x
    num_layers = len(heads) - 1
    for l in range(num_layers):
        h = gat_conv_ref(h, adj, layer_params[l], negative_slope, True)
        h = h.reshape(h.shape[0], -1)                         # flatten(1)
    out = gat_conv_ref(h, adj, layer_params[-1], negative_slope, False)
    return jnp.mean(out, axis=1)                              # mean over heads


# ----------------------------------- demo ------------------------------------

if __name__ == "__main__":
    key = jax.random.PRNGKey(0)
    num_nodes, in_dim, num_hidden, num_classes = 64, 16, 32, 7
    heads = (4, 4, 1)          # num_layers=2 hidden GATConv + output GATConv

    kg, kx, kp = jax.random.split(key, 3)
    # random undirected graph with self loops; adj[dst, src] = 1.0 iff edge
    a = jax.random.bernoulli(kg, 0.15, (num_nodes, num_nodes))
    adj = ((a | a.T) | jnp.eye(num_nodes, dtype=bool)).astype(jnp.float32)
    x = jax.random.normal(kx, (num_nodes, in_dim), jnp.float32)
    params = make_gat_params(kp, in_dim, num_hidden, num_classes, heads)

    logits = gat_forward(x, adj, params, heads, num_hidden, num_classes)
    logits = jax.block_until_ready(logits)

    ref = gat_ref(x, adj, params, heads, num_classes)
    assert logits.shape == (num_nodes, num_classes)
    err = float(jnp.max(jnp.abs(logits - ref)))
    assert jnp.allclose(logits, ref, atol=5e-3, rtol=5e-3), err
    print("KERNEL_OK")
</pallas_src>

<mosaic_0001>
module attributes {stable_mosaic.version = 11 : i64} {
  func.func @gat_proj_kernel(%arg0: i32, %arg1: memref<32x128xf32, #tpu.memory_space<vmem>>, %arg2: memref<128x512xf32, #tpu.memory_space<vmem>>, %arg3: memref<512x128xf32, #tpu.memory_space<vmem>>, %arg4: memref<512x128xf32, #tpu.memory_space<vmem>>, %arg5: memref<32x512xf32, #tpu.memory_space<vmem>>, %arg6: memref<32x128xf32, #tpu.memory_space<vmem>>, %arg7: memref<32x128xf32, #tpu.memory_space<vmem>>) attributes {dimension_semantics = [#tpu.dimension_semantics<parallel>], iteration_bounds = array<i64: 2>, scalar_prefetch = 0 : i64, scratch_operands = 0 : i64, tpu.core_type = #tpu.core_type<tc>, window_params = [{transform_indices = @transform_0, window_bounds = array<i64: 32, 128>}, {pipeline_mode = #tpu.pipeline_mode<synchronous>, transform_indices = @transform_1, window_bounds = array<i64: 128, 512>}, {pipeline_mode = #tpu.pipeline_mode<synchronous>, transform_indices = @transform_2, window_bounds = array<i64: 512, 128>}, {pipeline_mode = #tpu.pipeline_mode<synchronous>, transform_indices = @transform_3, window_bounds = array<i64: 512, 128>}, {transform_indices = @transform_4, window_bounds = array<i64: 32, 512>}, {transform_indices = @transform_5, window_bounds = array<i64: 32, 128>}, {transform_indices = @transform_6, window_bounds = array<i64: 32, 128>}]} {
    %c0 = arith.constant 0 : index
    %c0_0 = arith.constant 0 : index
    %0 = vector.load %arg1[%c0, %c0_0] : memref<32x128xf32, #tpu.memory_space<vmem>>, vector<32x128xf32>
    %c0_1 = arith.constant 0 : index
    %c0_2 = arith.constant 0 : index
    %1 = vector.load %arg2[%c0_1, %c0_2] : memref<128x512xf32, #tpu.memory_space<vmem>>, vector<128x512xf32>
    %cst = arith.constant dense<0.000000e+00> : vector<32x512xf32>
    %2 = tpu.matmul %0, %1, %cst {dimension_numbers = #tpu.dot_dimension_numbers<[1], [0], [0], [1], [0, 0, 1, 1], [], []>} : vector<32x128xf32>, vector<128x512xf32>, vector<32x512xf32> -> vector<32x512xf32>
    %c0_3 = arith.constant 0 : index
    %c0_4 = arith.constant 0 : index
    %3 = vector.load %arg5[%c0_3, %c0_4] : memref<32x512xf32, #tpu.memory_space<vmem>>, vector<32x512xf32>
    tpu.vector_store %arg5[%c0_3, %c0_4], %2 {strides = array<i32>} : memref<32x512xf32, #tpu.memory_space<vmem>>, vector<32x512xf32>,
    %c0_5 = arith.constant 0 : index
    %c0_6 = arith.constant 0 : index
    %4 = vector.load %arg3[%c0_5, %c0_6] : memref<512x128xf32, #tpu.memory_space<vmem>>, vector<512x128xf32>
    %cst_7 = arith.constant dense<0.000000e+00> : vector<32x128xf32>
    %5 = tpu.matmul %2, %4, %cst_7 {dimension_numbers = #tpu.dot_dimension_numbers<[1], [0], [0], [1], [0, 0, 1, 1], [], []>} : vector<32x512xf32>, vector<512x128xf32>, vector<32x128xf32> -> vector<32x128xf32>
    %c0_8 = arith.constant 0 : index
    %c0_9 = arith.constant 0 : index
    %6 = vector.load %arg6[%c0_8, %c0_9] : memref<32x128xf32, #tpu.memory_space<vmem>>, vector<32x128xf32>
    tpu.vector_store %arg6[%c0_8, %c0_9], %5 {strides = array<i32>} : memref<32x128xf32, #tpu.memory_space<vmem>>, vector<32x128xf32>,
    %c0_10 = arith.constant 0 : index
    %c0_11 = arith.constant 0 : index
    %7 = vector.load %arg4[%c0_10, %c0_11] : memref<512x128xf32, #tpu.memory_space<vmem>>, vector<512x128xf32>
    %cst_12 = arith.constant dense<0.000000e+00> : vector<32x128xf32>
    %8 = tpu.matmul %2, %7, %cst_12 {dimension_numbers = #tpu.dot_dimension_numbers<[1], [0], [0], [1], [0, 0, 1, 1], [], []>} : vector<32x512xf32>, vector<512x128xf32>, vector<32x128xf32> -> vector<32x128xf32>
    %c0_13 = arith.constant 0 : index
    %c0_14 = arith.constant 0 : index
    %9 = vector.load %arg7[%c0_13, %c0_14] : memref<32x128xf32, #tpu.memory_space<vmem>>, vector<32x128xf32>
    tpu.vector_store %arg7[%c0_13, %c0_14], %8 {strides = array<i32>} : memref<32x128xf32, #tpu.memory_space<vmem>>, vector<32x128xf32>,
    return
  }
  func.func @transform_0(%arg0: i32) -> (i32, i32) {
    %c0_i32 = arith.constant 0 : i32
    %c0_i32_0 = arith.constant 0 : i32
    return %arg0, %c0_i32 : i32, i32
  }
  func.func @transform_1(%arg0: i32) -> (i32, i32) {
    %c0_i32 = arith.constant 0 : i32
    %c0_i32_0 = arith.constant 0 : i32
    %c0_i32_1 = arith.constant 0 : i32
    return %c0_i32, %c0_i32_0 : i32, i32
  }
  func.func @transform_2(%arg0: i32) -> (i32, i32) {
    %c0_i32 = arith.constant 0 : i32
    %c0_i32_0 = arith.constant 0 : i32
    %c0_i32_1 = arith.constant 0 : i32
    return %c0_i32, %c0_i32_0 : i32, i32
  }
  func.func @transform_3(%arg0: i32) -> (i32, i32) {
    %c0_i32 = arith.constant 0 : i32
    %c0_i32_0 = arith.constant 0 : i32
    %c0_i32_1 = arith.constant 0 : i32
    return %c0_i32, %c0_i32_0 : i32, i32
  }
  func.func @transform_4(%arg0: i32) -> (i32, i32) {
    %c0_i32 = arith.constant 0 : i32
    %c0_i32_0 = arith.constant 0 : i32
    return %arg0, %c0_i32 : i32, i32
  }
  func.func @transform_5(%arg0: i32) -> (i32, i32) {
    %c0_i32 = arith.constant 0 : i32
    %c0_i32_0 = arith.constant 0 : i32
    return %arg0, %c0_i32 : i32, i32
  }
  func.func @transform_6(%arg0: i32) -> (i32, i32) {
    %c0_i32 = arith.constant 0 : i32
    %c0_i32_0 = arith.constant 0 : i32
    return %arg0, %c0_i32 : i32, i32
  }
}

</mosaic_0001>

<llo_original>
// kernel: tpu_custom_call.1
$region0: #{tpu_custom_call.1}
  #allocation0 [shape = 'u32[]', space=smem, size = 0x4, offset = 0x4, fixed_abs, tag = 'smem constant byte address 0x4 - core index']
  #allocation1 [shape = 'u32[144,128]{1,0:T(1,128)}', space=vmem, size = 0x12000, scoped, tag = 'internal scratch']
  %s0 = inlined_call_operand.hbm [shape: f32[64,128], index: 0, kind: input, shape index: {}]
  %s1 = inlined_call_operand.hbm [shape: f32[128,512], index: 1, kind: input, shape index: {}]
  %s2 = inlined_call_operand.hbm [shape: f32[512,128], index: 2, kind: input, shape index: {}]
  %s3 = inlined_call_operand.hbm [shape: f32[512,128], index: 3, kind: input, shape index: {}]
  %s4 = inlined_call_operand.hbm [shape: f32[64,512], index: 4, kind: output, shape index: {0}]
  %s5 = inlined_call_operand.hbm [shape: f32[64,128], index: 5, kind: output, shape index: {1}]
  %s6 = inlined_call_operand.hbm [shape: f32[64,128], index: 6, kind: output, shape index: {2}]
  %7 = xla_tuple %s4, %s5, %s6
  %s8 = sld [smem:[#allocation0]]
  $region81: #{tpu_custom_call.1} parent=0
    _
  %s10 = ssub.s32 1, %s8
  %s11 = scalar_select 0, %s10, %s8
  $region1: #{tpu_custom_call.1} parent=0
    #allocation2 [shape = 'u8[32768]{0}', space=vmem, size = 0x8000, scoped, tag = 'input window, operand 0']
    #allocation3 [shape = 's32[2]{0}', space=sflag, size = 0x8, scoped, tag = 'scoped memory for tpu_custom_call.1']
    #allocation4 [shape = 's32[2]{0}', space=sflag, size = 0x8, scoped, tag = 'scoped memory for tpu_custom_call.1']
    #allocation5 [shape = 'u8[262144]{0}', space=vmem, size = 0x40000, scoped, tag = 'input window, operand 1, single buffered']
    #allocation6 [shape = 's32[1]{0}', space=sflag, size = 0x4, scoped, tag = 'scoped memory for tpu_custom_call.1']
    #allocation7 [shape = 'u8[262144]{0}', space=vmem, size = 0x40000, scoped, tag = 'input window, operand 2, single buffered']
    #allocation8 [shape = 'u8[262144]{0}', space=vmem, size = 0x40000, scoped, tag = 'input window, operand 3, single buffered']
    #allocation9 [shape = 's32[1]{0}', space=sflag, size = 0x4, scoped, tag = 'scoped memory for tpu_custom_call.1']
    #allocation10 [shape = 'u8[131072]{0}', space=vmem, size = 0x20000, scoped, tag = 'output window, operand 0']
    #allocation11 [shape = 'u8[32768]{0}', space=vmem, size = 0x8000, scoped, tag = 'output window, operand 1']
    #allocation12 [shape = 's32[2]{0}', space=sflag, size = 0x8, scoped, tag = 'scoped memory for tpu_custom_call.1']
    #allocation13 [shape = 'u8[32768]{0}', space=vmem, size = 0x8000, scoped, tag = 'output window, operand 2']
    %12 = vsyncpa [#allocation3], 0
    %s13 = scalar_lea.sflag [#allocation3], 1
    %14 = vsyncpa %s13, 0
    %15 = vsyncpa [#allocation6], 0
    %16 = vsyncpa [#allocation9], 0
    %17 = vsyncpa [#allocation4], 0
    %s18 = scalar_lea.sflag [#allocation4], 1
    %19 = vsyncpa %s18, 0
    %20 = vsyncpa [#allocation12], 0
    %s21 = scalar_lea.sflag [#allocation12], 1
    %22 = vsyncpa %s21, 0
    loop: start=0, step=1, limit=4
    $region2: #{tpu_custom_call.1} parent=1 // loop_pre_header
      _
    $region3: #{tpu_custom_call.1} parent=1 // loop_header
      %s24 = sphi 0, %s28
      %p25 = scmp.ge.s32.totalorder %s24, 4
      %s34 = sphi 0, %s36
      %s37 = sphi 0, %s34
      %s38 = sphi 0, %s37
      %s54 = sphi 0, %s38
      %s58 = sphi 0, %s58
      %s60 = sphi 0, %s58
      %s61 = sphi 0, %s60
      %s75 = sphi 0, %s61
      %s79 = sphi 0, %s79
      %s81 = sphi 0, %s79
      %s82 = sphi 0, %s81
      %s96 = sphi 0, %s82
      %s100 = sphi 0, %s100
      %s102 = sphi 0, %s100
      %s103 = sphi 0, %s102
      %s117 = sphi 0, %s103
      %s123 = sphi 0, %s125
      %s126 = sphi 0, %s123
      %s127 = sphi 0, %s126
      %s143 = sphi 0, %s127
      %s149 = sphi 0, %s151
      %s152 = sphi 0, %s149
      %s153 = sphi 0, %s152
      %s169 = sphi 0, %s153
      %s175 = sphi 0, %s177
      %s178 = sphi 0, %s175
      %s179 = sphi 0, %s178
      %s195 = sphi 0, %s179
    $region4: #{tpu_custom_call.1} parent=1 // loop_header_branch
      %27 = sbr.rel (%p25) target = $region8
    $region5: #{tpu_custom_call.1} parent=1 // loop_body
      %s29 = ssub.s32 %s24, 1
      %s30 = ssub.s32 %s24, 2
      %s31 = sadd.s32 %s24, 1
      %s32 = ssub.s32 %s24, %s31
      %p33 = scmp.eq.s32.totalorder %s32, 0
      %s35 = sadd.s32 %s34, 1
      %s36 = scalar_select %p33, %s34, %s35
      %p39 = pneg %p33
      %p40 = scmp.eq.s32.totalorder %s24, 1
      %p41 = por %p39, %p40
      %p42 = scmp.ne.s32.totalorder %s34, %s37
      %p43 = scmp.eq.s32.totalorder %s24, 0
      %p44 = por %p42, %p43
      %p45 = scmp.ne.s32.totalorder %s34, %s37
      %p46 = scmp.eq.s32.totalorder %s29, 1
      %p47 = por %p45, %p46
      %p48 = scmp.ne.s32.totalorder %s37, %s38
      %p49 = scmp.eq.s32.totalorder %s29, 0
      %p50 = por %p48, %p49
      %p51 = scmp.ne.s32.totalorder %s37, %s38
      %p52 = scmp.eq.s32.totalorder %s30, 1
      %p53 = por %p51, %p52
      %p55 = scmp.ne.s32.totalorder %s38, %s54
      %p56 = scmp.eq.s32.totalorder %s30, 0
      %p57 = por %p55, %p56
      %s59 = sadd.s32 %s58, 1
      %p62 = scmp.eq.s32.totalorder %s24, 1
      %p63 = scmp.ne.s32.totalorder %s58, %s60
      %p64 = scmp.eq.s32.totalorder %s24, 0
      %p65 = por %p63, %p64
      %p66 = scmp.ne.s32.totalorder %s58, %s60
      %p67 = scmp.eq.s32.totalorder %s29, 1
      %p68 = por %p66, %p67
      %p69 = scmp.ne.s32.totalorder %s60, %s61
      %p70 = scmp.eq.s32.totalorder %s29, 0
      %p71 = por %p69, %p70
      %p72 = scmp.ne.s32.totalorder %s60, %s61
      %p73 = scmp.eq.s32.totalorder %s30, 1
      %p74 = por %p72, %p73
      %p76 = scmp.ne.s32.totalorder %s61, %s75
      %p77 = scmp.eq.s32.totalorder %s30, 0
      %p78 = por %p76, %p77
      %s80 = sadd.s32 %s79, 1
      %p83 = scmp.eq.s32.totalorder %s24, 1
      %p84 = scmp.ne.s32.totalorder %s79, %s81
      %p85 = scmp.eq.s32.totalorder %s24, 0
      %p86 = por %p84, %p85
      %p87 = scmp.ne.s32.totalorder %s79, %s81
      %p88 = scmp.eq.s32.totalorder %s29, 1
      %p89 = por %p87, %p88
      %p90 = scmp.ne.s32.totalorder %s81, %s82
      %p91 = scmp.eq.s32.totalorder %s29, 0
      %p92 = por %p90, %p91
      %p93 = scmp.ne.s32.totalorder %s81, %s82
      %p94 = scmp.eq.s32.totalorder %s30, 1
      %p95 = por %p93, %p94
      %p97 = scmp.ne.s32.totalorder %s82, %s96
      %p98 = scmp.eq.s32.totalorder %s30, 0
      %p99 = por %p97, %p98
      %s101 = sadd.s32 %s100, 1
      %p104 = scmp.eq.s32.totalorder %s24, 1
      %p105 = scmp.ne.s32.totalorder %s100, %s102
      %p106 = scmp.eq.s32.totalorder %s24, 0
      %p107 = por %p105, %p106
      %p108 = scmp.ne.s32.totalorder %s100, %s102
      %p109 = scmp.eq.s32.totalorder %s29, 1
      %p110 = por %p108, %p109
      %p111 = scmp.ne.s32.totalorder %s102, %s103
      %p112 = scmp.eq.s32.totalorder %s29, 0
      %p113 = por %p111, %p112
      %p114 = scmp.ne.s32.totalorder %s102, %s103
      %p115 = scmp.eq.s32.totalorder %s30, 1
      %p116 = por %p114, %p115
      %p118 = scmp.ne.s32.totalorder %s103, %s117
      %p119 = scmp.eq.s32.totalorder %s30, 0
      %p120 = por %p118, %p119
      %s121 = ssub.s32 %s24, %s31
      %p122 = scmp.eq.s32.totalorder %s121, 0
      %s124 = sadd.s32 %s123, 1
      %s125 = scalar_select %p122, %s123, %s124
      %p128 = pneg %p122
      %p129 = scmp.eq.s32.totalorder %s24, 1
      %p130 = por %p128, %p129
      %p131 = scmp.ne.s32.totalorder %s123, %s126
      %p132 = scmp.eq.s32.totalorder %s24, 0
      %p133 = por %p131, %p132
      %p134 = scmp.ne.s32.totalorder %s123, %s126
      %p135 = scmp.eq.s32.totalorder %s29, 1
      %p136 = por %p134, %p135
      %p137 = scmp.ne.s32.totalorder %s126, %s127
      %p138 = scmp.eq.s32.totalorder %s29, 0
      %p139 = por %p137, %p138
      %p140 = scmp.ne.s32.totalorder %s126, %s127
      %p141 = scmp.eq.s32.totalorder %s30, 1
      %p142 = por %p140, %p141
      %p144 = scmp.ne.s32.totalorder %s127, %s143
      %p145 = scmp.eq.s32.totalorder %s30, 0
      %p146 = por %p144, %p145
      %s147 = ssub.s32 %s24, %s31
      %p148 = scmp.eq.s32.totalorder %s147, 0
      %s150 = sadd.s32 %s149, 1
      %s151 = scalar_select %p148, %s149, %s150
      %p154 = pneg %p148
      %p155 = scmp.eq.s32.totalorder %s24, 1
      %p156 = por %p154, %p155
      %p157 = scmp.ne.s32.totalorder %s149, %s152
      %p158 = scmp.eq.s32.totalorder %s24, 0
      %p159 = por %p157, %p158
      %p160 = scmp.ne.s32.totalorder %s149, %s152
      %p161 = scmp.eq.s32.totalorder %s29, 1
      %p162 = por %p160, %p161
      %p163 = scmp.ne.s32.totalorder %s152, %s153
      %p164 = scmp.eq.s32.totalorder %s29, 0
      %p165 = por %p163, %p164
      %p166 = scmp.ne.s32.totalorder %s152, %s153
      %p167 = scmp.eq.s32.totalorder %s30, 1
      %p168 = por %p166, %p167
      %p170 = scmp.ne.s32.totalorder %s153, %s169
      %p171 = scmp.eq.s32.totalorder %s30, 0
      %p172 = por %p170, %p171
      %s173 = ssub.s32 %s24, %s31
      %p174 = scmp.eq.s32.totalorder %s173, 0
      %s176 = sadd.s32 %s175, 1
      %s177 = scalar_select %p174, %s175, %s176
      %p180 = pneg %p174
      %p181 = scmp.eq.s32.totalorder %s24, 1
      %p182 = por %p180, %p181
      %p183 = scmp.ne.s32.totalorder %s175, %s178
      %p184 = scmp.eq.s32.totalorder %s24, 0
      %p185 = por %p183, %p184
      %p186 = scmp.ne.s32.totalorder %s175, %s178
      %p187 = scmp.eq.s32.totalorder %s29, 1
      %p188 = por %p186, %p187
      %p189 = scmp.ne.s32.totalorder %s178, %s179
      %p190 = scmp.eq.s32.totalorder %s29, 0
      %p191 = por %p189, %p190
      %p192 = scmp.ne.s32.totalorder %s178, %s179
      %p193 = scmp.eq.s32.totalorder %s30, 1
      %p194 = por %p192, %p193
      %p196 = scmp.ne.s32.totalorder %s179, %s195
      %p197 = scmp.eq.s32.totalorder %s30, 0
      %p198 = por %p196, %p197
      %p199 = scmp.le.s32.totalorder 1, %s24
      %p200 = scmp.lt.s32.totalorder %s24, 3
      %p201 = pnand %p199, %p200
      %p202 = pneg %p201
      // Predicated region
      $region9: #{tpu_custom_call.1} parent=5 // pred_check
        _
      $region10: #{tpu_custom_call.1} parent=5 // pred_check_branch
        %204 = sbr.rel (%p201) target = $region12
      $region11: #{tpu_custom_call.1} parent=5 // pred_region
        %s205 = ssub.s32 %s24, 1
        // Predicated region
        $region13: #{tpu_custom_call.1} parent=11 // pred_check
          %p206 = pneg %p71
        $region14: #{tpu_custom_call.1} parent=11 // pred_check_branch
          %208 = sbr.rel (%p206) target = $region16
        $region15: #{tpu_custom_call.1} parent=11 // pred_region
          %s210 = ssub.s32 8192, 8192
          %211 = vsyncadd [#allocation6], %s210
          %s212 = sshll.u32 [#allocation5], 4
          %s213 = int_to_ptr.vmem [resolvable:$true] %s212
          %218 = dma.hbm_to_vmem [thread:$0]  %s1, 8192, %s213, [#allocation6], 512, 512, 32
        $region16: #{tpu_custom_call.1} parent=11 // pred_fallthru
          _
        // Predicated region
        $region17: #{tpu_custom_call.1} parent=11 // pred_check
          %p219 = pneg %p92
        $region18: #{tpu_custom_call.1} parent=11 // pred_check_branch
          %221 = sbr.rel (%p219) target = $region20
        $region19: #{tpu_custom_call.1} parent=11 // pred_region
          %s223 = ssub.s32 8192, 8192
          %224 = vsyncadd [#allocation6], %s223
          %s225 = sshll.u32 [#allocation7], 4
          %s226 = int_to_ptr.vmem [resolvable:$true] %s225
          %231 = dma.hbm_to_vmem [thread:$0]  %s2, 8192, %s226, [#allocation6], 128, 128, 8
        $region20: #{tpu_custom_call.1} parent=11 // pred_fallthru
          _
        // Predicated region
        $region21: #{tpu_custom_call.1} parent=11 // pred_check
          %p232 = pneg %p113
        $region22: #{tpu_custom_call.1} parent=11 // pred_check_branch
          %234 = sbr.rel (%p232) target = $region24
        $region23: #{tpu_custom_call.1} parent=11 // pred_region
          %s236 = ssub.s32 8192, 8192
          %237 = vsyncadd [#allocation9], %s236
          %s238 = sshll.u32 [#allocation8], 4
          %s239 = int_to_ptr.vmem [resolvable:$true] %s238
          %244 = dma.hbm_to_vmem [thread:$0]  %s3, 8192, %s239, [#allocation9], 128, 128, 8
        $region24: #{tpu_custom_call.1} parent=11 // pred_fallthru
          _
      $region12: #{tpu_custom_call.1} parent=5 // pred_fallthru
        _
      %p245 = scmp.lt.s32.totalorder %s24, 2
      // Predicated region
      $region25: #{tpu_custom_call.1} parent=5 // pred_check
        %p246 = pneg %p245
      $region26: #{tpu_custom_call.1} parent=5 // pred_check_branch
        %248 = sbr.rel (%p246) target = $region28
      $region27: #{tpu_custom_call.1} parent=5 // pred_region
        // Predicated region
        $region29: #{tpu_custom_call.1} parent=27 // pred_check
          %p249 = pneg %p44
        $region30: #{tpu_custom_call.1} parent=27 // pred_check_branch
          %251 = sbr.rel (%p249) target = $region32
        $region31: #{tpu_custom_call.1} parent=27 // pred_region
          %s252 = sand.u32 %s34, 1
          %s253 = scalar_lea.sflag [#allocation3], %s252
          %s254 = sand.u32 %s34, 1
          %s255 = smul.addr %s254, 32
          %s256 = scalar_lea.vmem [#allocation2], %s255
          %s257 = smul.u32 4, %s24
          %s259 = ssub.s32 512, 512
          %260 = vsyncadd %s253, %s259
          %s261 = smul.addr %s257, 128
          %s262 = scalar_lea.hbm %s0, %s261
          %s263 = sshll.u32 %s256, 4
          %s264 = int_to_ptr.vmem [resolvable:$true] %s263
          %269 = dma.hbm_to_vmem [thread:$0]  %s262, 512, %s264, %s253, 128, 128, 8
        $region32: #{tpu_custom_call.1} parent=27 // pred_fallthru
          _
      $region28: #{tpu_custom_call.1} parent=5 // pred_fallthru
        _
      %p270 = scmp.le.s32.totalorder 1, %s24
      %p271 = scmp.lt.s32.totalorder %s24, 3
      %p272 = pnand %p270, %p271
      %p273 = pneg %p272
      // Predicated region
      $region33: #{tpu_custom_call.1} parent=5 // pred_check
        _
      $region34: #{tpu_custom_call.1} parent=5 // pred_check_branch
        %275 = sbr.rel (%p272) target = $region36
      $region35: #{tpu_custom_call.1} parent=5 // pred_region
        %s276 = ssub.s32 %s24, 1
        %s277 = sand.u32 %s37, 1
        %s278 = scalar_lea.sflag [#allocation3], %s277
        %s279 = sand.u32 %s37, 1
        %s280 = smul.addr %s279, 32
        %s281 = scalar_lea.vmem [#allocation2], %s280
        // Predicated region
        $region37: #{tpu_custom_call.1} parent=35 // pred_check
          %p282 = pneg %p50
        $region38: #{tpu_custom_call.1} parent=35 // pred_check_branch
          %284 = sbr.rel (%p282) target = $region40
        $region39: #{tpu_custom_call.1} parent=35 // pred_region
          %285 = dma.done %s278, 512
        $region40: #{tpu_custom_call.1} parent=35 // pred_fallthru
          _
        // Predicated region
        $region41: #{tpu_custom_call.1} parent=35 // pred_check
          %p286 = pneg %p71
        $region42: #{tpu_custom_call.1} parent=35 // pred_check_branch
          %288 = sbr.rel (%p286) target = $region44
        $region43: #{tpu_custom_call.1} parent=35 // pred_region
          %289 = dma.done [#allocation6], 8192
        $region44: #{tpu_custom_call.1} parent=35 // pred_fallthru
          _
        // Predicated region
        $region45: #{tpu_custom_call.1} parent=35 // pred_check
          %p290 = pneg %p92
        $region46: #{tpu_custom_call.1} parent=35 // pred_check_branch
          %292 = sbr.rel (%p290) target = $region48
        $region47: #{tpu_custom_call.1} parent=35 // pred_region
          %293 = dma.done [#allocation6], 8192
        $region48: #{tpu_custom_call.1} parent=35 // pred_fallthru
          _
        // Predicated region
        $region49: #{tpu_custom_call.1} parent=35 // pred_check
          %p294 = pneg %p113
        $region50: #{tpu_custom_call.1} parent=35 // pred_check_branch
          %296 = sbr.rel (%p294) target = $region52
        $region51: #{tpu_custom_call.1} parent=35 // pred_region
          %297 = dma.done [#allocation9], 8192
        $region52: #{tpu_custom_call.1} parent=35 // pred_fallthru
          _
        %s298 = sand.u32 %s37, 1
        %s299 = scalar_lea.sflag [#allocation3], %s298
        %s300 = sand.u32 %s37, 1
        %s301 = smul.addr %s300, 32
        %s302 = scalar_lea.vmem [#allocation2], %s301
        %p303 = pneg %p50
        %p304 = pneg %p47
        %p305 = pneg %p71
        %p306 = pneg %p68
        %p307 = pneg %p92
        %p308 = pneg %p89
        %p309 = pneg %p113
        %p310 = pneg %p110
        %p311 = pneg %p139
        %p312 = pneg %p136
        %s313 = sand.u32 %s126, 1
        %s314 = scalar_lea.sflag [#allocation4], %s313
        %s315 = sand.u32 %s126, 1
        %s316 = smul.addr %s315, 128
        %s317 = scalar_lea.vmem [#allocation10], %s316
        %p318 = pneg %p165
        %p319 = pneg %p162
        %s320 = sand.u32 %s29, 1
        %s321 = scalar_lea.sflag [#allocation12], %s320
        %s322 = sand.u32 %s152, 1
        %s323 = smul.addr %s322, 32
        %s324 = scalar_lea.vmem [#allocation11], %s323
        %p325 = pneg %p191
        %p326 = pneg %p188
        %s327 = sand.u32 %s29, 1
        %s328 = scalar_lea.sflag [#allocation12], %s327
        %s329 = sand.u32 %s178, 1
        %s330 = smul.addr %s329, 32
        %s331 = scalar_lea.vmem [#allocation13], %s330
        %s332 = smul.u32 4, %s29
        %s333 = smul.u32 4, %s29
        %s334 = smul.u32 4, %s29
        %s335 = smul.u32 4, %s29
        %v336 = vld [vmem:[%s281] sm:$0xff]
        %v337 = vld [vmem:[%s281 + $0x8] sm:$0xff]
        %v338 = vld [vmem:[%s281 + $0x10] sm:$0xff]
        %v339 = vld [vmem:[%s281 + $0x18] sm:$0xff]
        %v340 = vld [vmem:[#allocation5] sm:$0xff]
        %v341 = vld [vmem:[#allocation5 + $0x8] sm:$0xff]
        %v342 = vld [vmem:[#allocation5 + $0x10] sm:$0xff]
        %v343 = vld [vmem:[#allocation5 + $0x18] sm:$0xff]
        %v344 = vld [vmem:[#allocation5 + $0x20] sm:$0xff]
        %v345 = vld [vmem:[#allocation5 + $0x28] sm:$0xff]
        %v346 = vld [vmem:[#allocation5 + $0x30] sm:$0xff]
        %v347 = vld [vmem:[#allocation5 + $0x38] sm:$0xff]
        %v348 = vld [vmem:[#allocation5 + $0x40] sm:$0xff]
        %v349 = vld [vmem:[#allocation5 + $0x48] sm:$0xff]
        %v350 = vld [vmem:[#allocation5 + $0x50] sm:$0xff]
        %v351 = vld [vmem:[#allocation5 + $0x58] sm:$0xff]
        %v352 = vld [vmem:[#allocation5 + $0x60] sm:$0xff]
        %v353 = vld [vmem:[#allocation5 + $0x68] sm:$0xff]
        %v354 = vld [vmem:[#allocation5 + $0x70] sm:$0xff]
        %v355 = vld [vmem:[#allocation5 + $0x78] sm:$0xff]
        %v356 = vld [vmem:[#allocation5 + $0x80] sm:$0xff]
        %v357 = vld [vmem:[#allocation5 + $0x88] sm:$0xff]
        %v358 = vld [vmem:[#allocation5 + $0x90] sm:$0xff]
        %v359 = vld [vmem:[#allocation5 + $0x98] sm:$0xff]
        %v360 = vld [vmem:[#allocation5 + $0xa0] sm:$0xff]
        %v361 = vld [vmem:[#allocation5 + $0xa8] sm:$0xff]
        %v362 = vld [vmem:[#allocation5 + $0xb0] sm:$0xff]
        %v363 = vld [vmem:[#allocation5 + $0xb8] sm:$0xff]
        %v364 = vld [vmem:[#allocation5 + $0xc0] sm:$0xff]
        %v365 = vld [vmem:[#allocation5 + $0xc8] sm:$0xff]
        %v366 = vld [vmem:[#allocation5 + $0xd0] sm:$0xff]
        %v367 = vld [vmem:[#allocation5 + $0xd8] sm:$0xff]
        %v368 = vld [vmem:[#allocation5 + $0xe0] sm:$0xff]
        %v369 = vld [vmem:[#allocation5 + $0xe8] sm:$0xff]
        %v370 = vld [vmem:[#allocation5 + $0xf0] sm:$0xff]
        %v371 = vld [vmem:[#allocation5 + $0xf8] sm:$0xff]
        %v372 = vld [vmem:[#allocation5 + $0x100] sm:$0xff]
        %v373 = vld [vmem:[#allocation5 + $0x108] sm:$0xff]
        %v374 = vld [vmem:[#allocation5 + $0x110] sm:$0xff]
        %v375 = vld [vmem:[#allocation5 + $0x118] sm:$0xff]
        %v376 = vld [vmem:[#allocation5 + $0x120] sm:$0xff]
        %v377 = vld [vmem:[#allocation5 + $0x128] sm:$0xff]
        %v378 = vld [vmem:[#allocation5 + $0x130] sm:$0xff]
        %v379 = vld [vmem:[#allocation5 + $0x138] sm:$0xff]
        %v380 = vld [vmem:[#allocation5 + $0x140] sm:$0xff]
        %v381 = vld [vmem:[#allocation5 + $0x148] sm:$0xff]
        %v382 = vld [vmem:[#allocation5 + $0x150] sm:$0xff]
        %v383 = vld [vmem:[#allocation5 + $0x158] sm:$0xff]
        %v384 = vld [vmem:[#allocation5 + $0x160] sm:$0xff]
        %v385 = vld [vmem:[#allocation5 + $0x168] sm:$0xff]
        %v386 = vld [vmem:[#allocation5 + $0x170] sm:$0xff]
        %v387 = vld [vmem:[#allocation5 + $0x178] sm:$0xff]
        %v388 = vld [vmem:[#allocation5 + $0x180] sm:$0xff]
        %v389 = vld [vmem:[#allocation5 + $0x188] sm:$0xff]
        %v390 = vld [vmem:[#allocation5 + $0x190] sm:$0xff]
        %v391 = vld [vmem:[#allocation5 + $0x198] sm:$0xff]
        %v392 = vld [vmem:[#allocation5 + $0x1a0] sm:$0xff]
        %v393 = vld [vmem:[#allocation5 + $0x1a8] sm:$0xff]
        %v394 = vld [vmem:[#allocation5 + $0x1b0] sm:$0xff]
        %v395 = vld [vmem:[#allocation5 + $0x1b8] sm:$0xff]
        %v396 = vld [vmem:[#allocation5 + $0x1c0] sm:$0xff]
        %v397 = vld [vmem:[#allocation5 + $0x1c8] sm:$0xff]
        %v398 = vld [vmem:[#allocation5 + $0x1d0] sm:$0xff]
        %v399 = vld [vmem:[#allocation5 + $0x1d8] sm:$0xff]
        %v400 = vld [vmem:[#allocation5 + $0x1e0] sm:$0xff]
        %v401 = vld [vmem:[#allocation5 + $0x1e8] sm:$0xff]
        %v402 = vld [vmem:[#allocation5 + $0x1f0] sm:$0xff]
        %v403 = vld [vmem:[#allocation5 + $0x1f8] sm:$0xff]
        %404 = vmatprep.subr.mxu0 %v341
        %405 = vmatpush1.msra.mxu0 %v340
        %406 = vmatprep.subr.mxu0 %v345
        %407 = vmatpush1.msra.mxu0 %v344
        %408 = vmatprep.subr.mxu0 %v349
        %409 = vmatpush1.msra.mxu0 %v348
        %410 = vmatprep.subr.mxu0 %v353
        %411 = vmatpush1.msra.mxu0 %v352
        %412 = vmatprep.subr.mxu0 %v357
        %413 = vmatpush1.msra.mxu0 %v356
        %414 = vmatprep.subr.mxu0 %v361
        %415 = vmatpush1.msra.mxu0 %v360
        %416 = vmatprep.subr.mxu0 %v365
        %417 = vmatpush1.msra.mxu0 %v364
        %418 = vmatprep.subr.mxu0 %v369
        %419 = vmatpush1.msra.mxu0 %v368
        %420 = vmatprep.subr.mxu0 %v373
        %421 = vmatpush1.msra.mxu0 %v372
        %422 = vmatprep.subr.mxu0 %v377
        %423 = vmatpush1.msra.mxu0 %v376
        %424 = vmatprep.subr.mxu0 %v381
        %425 = vmatpush1.msra.mxu0 %v380
        %426 = vmatprep.subr.mxu0 %v385
        %427 = vmatpush1.msra.mxu0 %v384
        %428 = vmatprep.subr.mxu0 %v389
        %429 = vmatpush1.msra.mxu0 %v388
        %430 = vmatprep.subr.mxu0 %v393
        %431 = vmatpush1.msra.mxu0 %v392
        %432 = vmatprep.subr.mxu0 %v397
        %433 = vmatpush1.msra.mxu0 %v396
        %434 = vmatprep.subr.mxu0 %v401
        %435 = vmatpush1.msra.mxu0 %v400
        %436 = vmatprep.subr.mxu0 0.0
        %437 = vmatpush1.msra.mxu0 0.0
        %438 = vmatprep.subr.mxu0 0.0
        %439 = vmatpush1.msra.mxu0 0.0
        %440 = vmatprep.subr.mxu0 0.0
        %441 = vmatpush1.msra.mxu0 0.0
        %442 = vmatprep.subr.mxu0 0.0
        %443 = vmatpush1.msra.mxu0 0.0
        %444 = vmatprep.subr.mxu0 0.0
        %445 = vmatpush1.msra.mxu0 0.0
        %446 = vmatprep.subr.mxu0 0.0
        %447 = vmatpush1.msra.mxu0 0.0
        %448 = vmatprep.subr.mxu0 0.0
        %449 = vmatpush1.msra.mxu0 0.0
        %450 = vmatprep.subr.mxu0 0.0
        %451 = vmatpush1.msra.mxu0 0.0
        %452 = vmatprep.subr.mxu0 0.0
        %453 = vmatpush1.msra.mxu0 0.0
        %454 = vmatprep.subr.mxu0 0.0
        %455 = vmatpush1.msra.mxu0 0.0
        %456 = vmatprep.subr.mxu0 0.0
        %457 = vmatpush1.msra.mxu0 0.0
        %458 = vmatprep.subr.mxu0 0.0
        %459 = vmatpush1.msra.mxu0 0.0
        %460 = vmatprep.subr.mxu0 0.0
        %461 = vmatpush1.msra.mxu0 0.0
        %462 = vmatprep.subr.mxu0 0.0
        %463 = vmatpush1.msra.mxu0 0.0
        %464 = vmatprep.subr.mxu0 0.0
        %465 = vmatpush1.msra.mxu0 0.0
        %466 = vmatprep.subr.mxu0 0.0
        %467 = vmatpush1.msra.mxu0 0.0
        %468 = vmatprep.mubr.f32.mxu0 0.0
        %469 = vmatmul.mubr.f32.gmra.mrb[0].mxu0 %v336
        %v470 = vpop.f32.mrb[0].mxu0
        %v471 = vadd.f32 0.0, %v470
        %v472 = vpop.f32.mrb[0].mxu0
        %v473 = vadd.f32 0.0, %v472
        %474 = vmatprep.mubr.f32.mxu0 0.0
        %475 = vmatmul.mubr.f32.gmra.mrb[0].mxu0 %v337
        %v476 = vpop.f32.mrb[0].mxu0
        %v477 = vadd.f32 0.0, %v476
        %v478 = vpop.f32.mrb[0].mxu0
        %v479 = vadd.f32 0.0, %v478
        %480 = vmatprep.mubr.f32.mxu0 0.0
        %481 = vmatmul.mubr.f32.gmra.mrb[0].mxu0 %v338
        %v482 = vpop.f32.mrb[0].mxu0
        %v483 = vadd.f32 0.0, %v482
        %v484 = vpop.f32.mrb[0].mxu0
        %v485 = vadd.f32 0.0, %v484
        %486 = vmatprep.mubr.f32.mxu0 0.0
        %487 = vmatmul.mubr.f32.gmra.mrb[0].mxu0 %v339
        %v488 = vpop.f32.mrb[0].mxu0
        %v489 = vadd.f32 0.0, %v488
        %v490 = vpop.f32.mrb[0].mxu0
        %v491 = vadd.f32 0.0, %v490
        %492 = vdwg.mxu0
        %493 = vmatprep.subr.mxu0 %v343
        %494 = vmatpush1.msra.mxu0 %v342
        %495 = vmatprep.subr.mxu0 %v347
        %496 = vmatpush1.msra.mxu0 %v346
        %497 = vmatprep.subr.mxu0 %v351
        %498 = vmatpush1.msra.mxu0 %v350
        %499 = vmatprep.subr.mxu0 %v355
        %500 = vmatpush1.msra.mxu0 %v354
        %501 = vmatprep.subr.mxu0 %v359
        %502 = vmatpush1.msra.mxu0 %v358
        %503 = vmatprep.subr.mxu0 %v363
        %504 = vmatpush1.msra.mxu0 %v362
        %505 = vmatprep.subr.mxu0 %v367
        %506 = vmatpush1.msra.mxu0 %v366
        %507 = vmatprep.subr.mxu0 %v371
        %508 = vmatpush1.msra.mxu0 %v370
        %509 = vmatprep.subr.mxu0 %v375
        %510 = vmatpush1.msra.mxu0 %v374
        %511 = vmatprep.subr.mxu0 %v379
        %512 = vmatpush1.msra.mxu0 %v378
        %513 = vmatprep.subr.mxu0 %v383
        %514 = vmatpush1.msra.mxu0 %v382
        %515 = vmatprep.subr.mxu0 %v387
        %516 = vmatpush1.msra.mxu0 %v386
        %517 = vmatprep.subr.mxu0 %v391
        %518 = vmatpush1.msra.mxu0 %v390
        %519 = vmatprep.subr.mxu0 %v395
        %520 = vmatpush1.msra.mxu0 %v394
        %521 = vmatprep.subr.mxu0 %v399
        %522 = vmatpush1.msra.mxu0 %v398
        %523 = vmatprep.subr.mxu0 %v403
        %524 = vmatpush1.msra.mxu0 %v402
        %525 = vmatprep.subr.mxu0 0.0
        %526 = vmatpush1.msra.mxu0 0.0
        %527 = vmatprep.subr.mxu0 0.0
        %528 = vmatpush1.msra.mxu0 0.0
        %529 = vmatprep.subr.mxu0 0.0
        %530 = vmatpush1.msra.mxu0 0.0
        %531 = vmatprep.subr.mxu0 0.0
        %532 = vmatpush1.msra.mxu0 0.0
        %533 = vmatprep.subr.mxu0 0.0
        %534 = vmatpush1.msra.mxu0 0.0
        %535 = vmatprep.subr.mxu0 0.0
        %536 = vmatpush1.msra.mxu0 0.0
        %537 = vmatprep.subr.mxu0 0.0
        %538 = vmatpush1.msra.mxu0 0.0
        %539 = vmatprep.subr.mxu0 0.0
        %540 = vmatpush1.msra.mxu0 0.0
        %541 = vmatprep.subr.mxu0 0.0
        %542 = vmatpush1.msra.mxu0 0.0
        %543 = vmatprep.subr.mxu0 0.0
        %544 = vmatpush1.msra.mxu0 0.0
        %545 = vmatprep.subr.mxu0 0.0
        %546 = vmatpush1.msra.mxu0 0.0
        %547 = vmatprep.subr.mxu0 0.0
        %548 = vmatpush1.msra.mxu0 0.0
        %549 = vmatprep.subr.mxu0 0.0
        %550 = vmatpush1.msra.mxu0 0.0
        %551 = vmatprep.subr.mxu0 0.0
        %552 = vmatpush1.msra.mxu0 0.0
        %553 = vmatprep.subr.mxu0 0.0
        %554 = vmatpush1.msra.mxu0 0.0
        %555 = vmatprep.subr.mxu0 0.0
        %556 = vmatpush1.msra.mxu0 0.0
        %557 = vmatprep.mubr.f32.mxu0 0.0
        %558 = vmatmul.mubr.f32.gmra.mrb[0].mxu0 %v336
        %v559 = vpop.f32.mrb[0].mxu0
        %v560 = vadd.f32 0.0, %v559
        %v561 = vpop.f32.mrb[0].mxu0
        %v562 = vadd.f32 0.0, %v561
        %563 = vmatprep.mubr.f32.mxu0 0.0
        %564 = vmatmul.mubr.f32.gmra.mrb[0].mxu0 %v337
        %v565 = vpop.f32.mrb[0].mxu0
        %v566 = vadd.f32 0.0, %v565
        %v567 = vpop.f32.mrb[0].mxu0
        %v568 = vadd.f32 0.0, %v567
        %569 = vmatprep.mubr.f32.mxu0 0.0
        %570 = vmatmul.mubr.f32.gmra.mrb[0].mxu0 %v338
        %v571 = vpop.f32.mrb[0].mxu0
        %v572 = vadd.f32 0.0, %v571
        %v573 = vpop.f32.mrb[0].mxu0
        %v574 = vadd.f32 0.0, %v573
        %575 = vmatprep.mubr.f32.mxu0 0.0
        %576 = vmatmul.mubr.f32.gmra.mrb[0].mxu0 %v339
        %v577 = vpop.f32.mrb[0].mxu0
        %v578 = vadd.f32 0.0, %v577
        %v579 = vpop.f32.mrb[0].mxu0
        %v580 = vadd.f32 0.0, %v579
        %581 = vdwg.mxu0
        %582 = vst [vmem:[%s317] sm:$0xff] %v471
        %583 = vst [vmem:[%s317 + $0x8] sm:$0xff] %v473
        %584 = vst [vmem:[%s317 + $0x10] sm:$0xff] %v560
        %585 = vst [vmem:[%s317 + $0x18] sm:$0xff] %v562
        %586 = vst [vmem:[%s317 + $0x20] sm:$0xff] %v477
        %587 = vst [vmem:[%s317 + $0x28] sm:$0xff] %v479
        %588 = vst [vmem:[%s317 + $0x30] sm:$0xff] %v566
        %589 = vst [vmem:[%s317 + $0x38] sm:$0xff] %v568
        %590 = vst [vmem:[%s317 + $0x40] sm:$0xff] %v483
        %591 = vst [vmem:[%s317 + $0x48] sm:$0xff] %v485
        %592 = vst [vmem:[%s317 + $0x50] sm:$0xff] %v572
        %593 = vst [vmem:[%s317 + $0x58] sm:$0xff] %v574
        %594 = vst [vmem:[%s317 + $0x60] sm:$0xff] %v489
        %595 = vst [vmem:[%s317 + $0x68] sm:$0xff] %v491
        %596 = vst [vmem:[%s317 + $0x70] sm:$0xff] %v578
        %597 = vst [vmem:[%s317 + $0x78] sm:$0xff] %v580
        %v598 = vld [vmem:[#allocation7] sm:$0xff]
        %v599 = vld [vmem:[#allocation7 + $0x8] sm:$0xff]
        %v600 = vld [vmem:[#allocation7 + $0x10] sm:$0xff]
        %v601 = vld [vmem:[#allocation7 + $0x18] sm:$0xff]
        %v602 = vld [vmem:[#allocation7 + $0x20] sm:$0xff]
        %v603 = vld [vmem:[#allocation7 + $0x28] sm:$0xff]
        %v604 = vld [vmem:[#allocation7 + $0x30] sm:$0xff]
        %v605 = vld [vmem:[#allocation7 + $0x38] sm:$0xff]
        %v606 = vld [vmem:[#allocation7 + $0x40] sm:$0xff]
        %v607 = vld [vmem:[#allocation7 + $0x48] sm:$0xff]
        %v608 = vld [vmem:[#allocation7 + $0x50] sm:$0xff]
        %v609 = vld [vmem:[#allocation7 + $0x58] sm:$0xff]
        %v610 = vld [vmem:[#allocation7 + $0x60] sm:$0xff]
        %v611 = vld [vmem:[#allocation7 + $0x68] sm:$0xff]
        %v612 = vld [vmem:[#allocation7 + $0x70] sm:$0xff]
        %v613 = vld [vmem:[#allocation7 + $0x78] sm:$0xff]
        %v614 = vld [vmem:[#allocation7 + $0x80] sm:$0xff]
        %v615 = vld [vmem:[#allocation7 + $0x88] sm:$0xff]
        %v616 = vld [vmem:[#allocation7 + $0x90] sm:$0xff]
        %v617 = vld [vmem:[#allocation7 + $0x98] sm:$0xff]
        %v618 = vld [vmem:[#allocation7 + $0xa0] sm:$0xff]
        %v619 = vld [vmem:[#allocation7 + $0xa8] sm:$0xff]
        %v620 = vld [vmem:[#allocation7 + $0xb0] sm:$0xff]
        %v621 = vld [vmem:[#allocation7 + $0xb8] sm:$0xff]
        %v622 = vld [vmem:[#allocation7 + $0xc0] sm:$0xff]
        %v623 = vld [vmem:[#allocation7 + $0xc8] sm:$0xff]
        %v624 = vld [vmem:[#allocation7 + $0xd0] sm:$0xff]
        %v625 = vld [vmem:[#allocation7 + $0xd8] sm:$0xff]
        %v626 = vld [vmem:[#allocation7 + $0xe0] sm:$0xff]
        %v627 = vld [vmem:[#allocation7 + $0xe8] sm:$0xff]
        %v628 = vld [vmem:[#allocation7 + $0xf0] sm:$0xff]
        %v629 = vld [vmem:[#allocation7 + $0xf8] sm:$0xff]
        %v630 = vld [vmem:[#allocation7 + $0x100] sm:$0xff]
        %v631 = vld [vmem:[#allocation7 + $0x108] sm:$0xff]
        %v632 = vld [vmem:[#allocation7 + $0x110] sm:$0xff]
        %v633 = vld [vmem:[#allocation7 + $0x118] sm:$0xff]
        %v634 = vld [vmem:[#allocation7 + $0x120] sm:$0xff]
        %v635 = vld [vmem:[#allocation7 + $0x128] sm:$0xff]
        %v636 = vld [vmem:[#allocation7 + $0x130] sm:$0xff]
        %v637 = vld [vmem:[#allocation7 + $0x138] sm:$0xff]
        %v638 = vld [vmem:[#allocation7 + $0x140] sm:$0xff]
        %v639 = vld [vmem:[#allocation7 + $0x148] sm:$0xff]
        %v640 = vld [vmem:[#allocation7 + $0x150] sm:$0xff]
        %v641 = vld [vmem:[#allocation7 + $0x158] sm:$0xff]
        %v642 = vld [vmem:[#allocation7 + $0x160] sm:$0xff]
        %v643 = vld [vmem:[#allocation7 + $0x168] sm:$0xff]
        %v644 = vld [vmem:[#allocation7 + $0x170] sm:$0xff]
        %v645 = vld [vmem:[#allocation7 + $0x178] sm:$0xff]
        %v646 = vld [vmem:[#allocation7 + $0x180] sm:$0xff]
        %v647 = vld [vmem:[#allocation7 + $0x188] sm:$0xff]
        %v648 = vld [vmem:[#allocation7 + $0x190] sm:$0xff]
        %v649 = vld [vmem:[#allocation7 + $0x198] sm:$0xff]
        %v650 = vld [vmem:[#allocation7 + $0x1a0] sm:$0xff]
        %v651 = vld [vmem:[#allocation7 + $0x1a8] sm:$0xff]
        %v652 = vld [vmem:[#allocation7 + $0x1b0] sm:$0xff]
        %v653 = vld [vmem:[#allocation7 + $0x1b8] sm:$0xff]
        %v654 = vld [vmem:[#allocation7 + $0x1c0] sm:$0xff]
        %v655 = vld [vmem:[#allocation7 + $0x1c8] sm:$0xff]
        %v656 = vld [vmem:[#allocation7 + $0x1d0] sm:$0xff]
        %v657 = vld [vmem:[#allocation7 + $0x1d8] sm:$0xff]
        %v658 = vld [vmem:[#allocation7 + $0x1e0] sm:$0xff]
        %v659 = vld [vmem:[#allocation7 + $0x1e8] sm:$0xff]
        %v660 = vld [vmem:[#allocation7 + $0x1f0] sm:$0xff]
        %v661 = vld [vmem:[#allocation7 + $0x1f8] sm:$0xff]
        %662 = vmatprep.subr.mxu0 0.0
        %663 = vmatpush1.msra.mxu0 %v598
        %664 = vmatprep.subr.mxu0 0.0
        %665 = vmatpush1.msra.mxu0 %v599
        %666 = vmatprep.subr.mxu0 0.0
        %667 = vmatpush1.msra.mxu0 %v600
        %668 = vmatprep.subr.mxu0 0.0
        %669 = vmatpush1.msra.mxu0 %v601
        %670 = vmatprep.subr.mxu0 0.0
        %671 = vmatpush1.msra.mxu0 %v602
        %672 = vmatprep.subr.mxu0 0.0
        %673 = vmatpush1.msra.mxu0 %v603
        %674 = vmatprep.subr.mxu0 0.0
        %675 = vmatpush1.msra.mxu0 %v604
        %676 = vmatprep.subr.mxu0 0.0
        %677 = vmatpush1.msra.mxu0 %v605
        %678 = vmatprep.subr.mxu0 0.0
        %679 = vmatpush1.msra.mxu0 %v606
        %680 = vmatprep.subr.mxu0 0.0
        %681 = vmatpush1.msra.mxu0 %v607
        %682 = vmatprep.subr.mxu0 0.0
        %683 = vmatpush1.msra.mxu0 %v608
        %684 = vmatprep.subr.mxu0 0.0
        %685 = vmatpush1.msra.mxu0 %v609
        %686 = vmatprep.subr.mxu0 0.0
        %687 = vmatpush1.msra.mxu0 %v610
        %688 = vmatprep.subr.mxu0 0.0
        %689 = vmatpush1.msra.mxu0 %v611
        %690 = vmatprep.subr.mxu0 0.0
        %691 = vmatpush1.msra.mxu0 %v612
        %692 = vmatprep.subr.mxu0 0.0
        %693 = vmatpush1.msra.mxu0 %v613
        %694 = vmatprep.subr.mxu0 0.0
        %695 = vmatpush1.msra.mxu0 %v614
        %696 = vmatprep.subr.mxu0 0.0
        %697 = vmatpush1.msra.mxu0 %v615
        %698 = vmatprep.subr.mxu0 0.0
        %699 = vmatpush1.msra.mxu0 %v616
        %700 = vmatprep.subr.mxu0 0.0
        %701 = vmatpush1.msra.mxu0 %v617
        %702 = vmatprep.subr.mxu0 0.0
        %703 = vmatpush1.msra.mxu0 %v618
        %704 = vmatprep.subr.mxu0 0.0
        %705 = vmatpush1.msra.mxu0 %v619
        %706 = vmatprep.subr.mxu0 0.0
        %707 = vmatpush1.msra.mxu0 %v620
        %708 = vmatprep.subr.mxu0 0.0
        %709 = vmatpush1.msra.mxu0 %v621
        %710 = vmatprep.subr.mxu0 0.0
        %711 = vmatpush1.msra.mxu0 %v622
        %712 = vmatprep.subr.mxu0 0.0
        %713 = vmatpush1.msra.mxu0 %v623
        %714 = vmatprep.subr.mxu0 0.0
        %715 = vmatpush1.msra.mxu0 %v624
        %716 = vmatprep.subr.mxu0 0.0
        %717 = vmatpush1.msra.mxu0 %v625
        %718 = vmatprep.subr.mxu0 0.0
        %719 = vmatpush1.msra.mxu0 %v626
        %720 = vmatprep.subr.mxu0 0.0
        %721 = vmatpush1.msra.mxu0 %v627
        %722 = vmatprep.subr.mxu0 0.0
        %723 = vmatpush1.msra.mxu0 %v628
        %724 = vmatprep.subr.mxu0 0.0
        %725 = vmatpush1.msra.mxu0 %v629
        %726 = vmatprep.mubr.f32.mxu0 %v473
        %727 = vmatmul.mubr.f32.gmra.mrb[0].mxu0 %v471
        %v728 = vpop.f32.mrb[0].mxu0
        %v729 = vadd.f32 0.0, %v728
        %v730 = vpop.f32.mrb[0].mxu0
        %731 = vmatprep.mubr.f32.mxu0 %v479
        %732 = vmatmul.mubr.f32.gmra.mrb[0].mxu0 %v477
        %v733 = vpop.f32.mrb[0].mxu0
        %v734 = vadd.f32 0.0, %v733
        %v735 = vpop.f32.mrb[0].mxu0
        %736 = vmatprep.mubr.f32.mxu0 %v485
        %737 = vmatmul.mubr.f32.gmra.mrb[0].mxu0 %v483
        %v738 = vpop.f32.mrb[0].mxu0
        %v739 = vadd.f32 0.0, %v738
        %v740 = vpop.f32.mrb[0].mxu0
        %741 = vmatprep.mubr.f32.mxu0 %v491
        %742 = vmatmul.mubr.f32.gmra.mrb[0].mxu0 %v489
        %v743 = vpop.f32.mrb[0].mxu0
        %v744 = vadd.f32 0.0, %v743
        %v745 = vpop.f32.mrb[0].mxu0
        %746 = vdwg.mxu0
        %747 = vmatprep.subr.mxu0 0.0
        %748 = vmatpush1.msra.mxu0 %v630
        %749 = vmatprep.subr.mxu0 0.0
        %750 = vmatpush1.msra.mxu0 %v631
        %751 = vmatprep.subr.mxu0 0.0
        %752 = vmatpush1.msra.mxu0 %v632
        %753 = vmatprep.subr.mxu0 0.0
        %754 = vmatpush1.msra.mxu0 %v633
        %755 = vmatprep.subr.mxu0 0.0
        %756 = vmatpush1.msra.mxu0 %v634
        %757 = vmatprep.subr.mxu0 0.0
        %758 = vmatpush1.msra.mxu0 %v635
        %759 = vmatprep.subr.mxu0 0.0
        %760 = vmatpush1.msra.mxu0 %v636
        %761 = vmatprep.subr.mxu0 0.0
        %762 = vmatpush1.msra.mxu0 %v637
        %763 = vmatprep.subr.mxu0 0.0
        %764 = vmatpush1.msra.mxu0 %v638
        %765 = vmatprep.subr.mxu0 0.0
        %766 = vmatpush1.msra.mxu0 %v639
        %767 = vmatprep.subr.mxu0 0.0
        %768 = vmatpush1.msra.mxu0 %v640
        %769 = vmatprep.subr.mxu0 0.0
        %770 = vmatpush1.msra.mxu0 %v641
        %771 = vmatprep.subr.mxu0 0.0
        %772 = vmatpush1.msra.mxu0 %v642
        %773 = vmatprep.subr.mxu0 0.0
        %774 = vmatpush1.msra.mxu0 %v643
        %775 = vmatprep.subr.mxu0 0.0
        %776 = vmatpush1.msra.mxu0 %v644
        %777 = vmatprep.subr.mxu0 0.0
        %778 = vmatpush1.msra.mxu0 %v645
        %779 = vmatprep.subr.mxu0 0.0
        %780 = vmatpush1.msra.mxu0 %v646
        %781 = vmatprep.subr.mxu0 0.0
        %782 = vmatpush1.msra.mxu0 %v647
        %783 = vmatprep.subr.mxu0 0.0
        %784 = vmatpush1.msra.mxu0 %v648
        %785 = vmatprep.subr.mxu0 0.0
        %786 = vmatpush1.msra.mxu0 %v649
        %787 = vmatprep.subr.mxu0 0.0
        %788 = vmatpush1.msra.mxu0 %v650
        %789 = vmatprep.subr.mxu0 0.0
        %790 = vmatpush1.msra.mxu0 %v651
        %791 = vmatprep.subr.mxu0 0.0
        %792 = vmatpush1.msra.mxu0 %v652
        %793 = vmatprep.subr.mxu0 0.0
        %794 = vmatpush1.msra.mxu0 %v653
        %795 = vmatprep.subr.mxu0 0.0
        %796 = vmatpush1.msra.mxu0 %v654
        %797 = vmatprep.subr.mxu0 0.0
        %798 = vmatpush1.msra.mxu0 %v655
        %799 = vmatprep.subr.mxu0 0.0
        %800 = vmatpush1.msra.mxu0 %v656
        %801 = vmatprep.subr.mxu0 0.0
        %802 = vmatpush1.msra.mxu0 %v657
        %803 = vmatprep.subr.mxu0 0.0
        %804 = vmatpush1.msra.mxu0 %v658
        %805 = vmatprep.subr.mxu0 0.0
        %806 = vmatpush1.msra.mxu0 %v659
        %807 = vmatprep.subr.mxu0 0.0
        %808 = vmatpush1.msra.mxu0 %v660
        %809 = vmatprep.subr.mxu0 0.0
        %810 = vmatpush1.msra.mxu0 %v661
        %811 = vmatprep.mubr.f32.mxu0 %v562
        %812 = vmatmul.mubr.f32.gmra.mrb[0].mxu0 %v560
        %v813 = vpop.f32.mrb[0].mxu0
        %v814 = vadd.f32 %v729, %v813
        %v815 = vpop.f32.mrb[0].mxu0
        %816 = vmatprep.mubr.f32.mxu0 %v568
        %817 = vmatmul.mubr.f32.gmra.mrb[0].mxu0 %v566
        %v818 = vpop.f32.mrb[0].mxu0
        %v819 = vadd.f32 %v734, %v818
        %v820 = vpop.f32.mrb[0].mxu0
        %821 = vmatprep.mubr.f32.mxu0 %v574
        %822 = vmatmul.mubr.f32.gmra.mrb[0].mxu0 %v572
        %v823 = vpop.f32.mrb[0].mxu0
        %v824 = vadd.f32 %v739, %v823
        %v825 = vpop.f32.mrb[0].mxu0
        %826 = vmatprep.mubr.f32.mxu0 %v580
        %827 = vmatmul.mubr.f32.gmra.mrb[0].mxu0 %v578
        %v828 = vpop.f32.mrb[0].mxu0
        %v829 = vadd.f32 %v744, %v828
        %v830 = vpop.f32.mrb[0].mxu0
        %831 = vdwg.mxu0
        %832 = vst [vmem:[%s324] sm:$0xff] %v814
        %833 = vst [vmem:[%s324 + $0x8] sm:$0xff] %v819
        %834 = vst [vmem:[%s324 + $0x10] sm:$0xff] %v824
        %835 = vst [vmem:[%s324 + $0x18] sm:$0xff] %v829
        %v836 = vld [vmem:[#allocation8] sm:$0xff]
        %v837 = vld [vmem:[#allocation8 + $0x8] sm:$0xff]
        %v838 = vld [vmem:[#allocation8 + $0x10] sm:$0xff]
        %v839 = vld [vmem:[#allocation8 + $0x18] sm:$0xff]
        %v840 = vld [vmem:[#allocation8 + $0x20] sm:$0xff]
        %v841 = vld [vmem:[#allocation8 + $0x28] sm:$0xff]
        %v842 = vld [vmem:[#allocation8 + $0x30] sm:$0xff]
        %v843 = vld [vmem:[#allocation8 + $0x38] sm:$0xff]
        %v844 = vld [vmem:[#allocation8 + $0x40] sm:$0xff]
        %v845 = vld [vmem:[#allocation8 + $0x48] sm:$0xff]
        %v846 = vld [vmem:[#allocation8 + $0x50] sm:$0xff]
        %v847 = vld [vmem:[#allocation8 + $0x58] sm:$0xff]
        %v848 = vld [vmem:[#allocation8 + $0x60] sm:$0xff]
        %v849 = vld [vmem:[#allocation8 + $0x68] sm:$0xff]
        %v850 = vld [vmem:[#allocation8 + $0x70] sm:$0xff]
        %v851 = vld [vmem:[#allocation8 + $0x78] sm:$0xff]
        %v852 = vld [vmem:[#allocation8 + $0x80] sm:$0xff]
        %v853 = vld [vmem:[#allocation8 + $0x88] sm:$0xff]
        %v854 = vld [vmem:[#allocation8 + $0x90] sm:$0xff]
        %v855 = vld [vmem:[#allocation8 + $0x98] sm:$0xff]
        %v856 = vld [vmem:[#allocation8 + $0xa0] sm:$0xff]
        %v857 = vld [vmem:[#allocation8 + $0xa8] sm:$0xff]
        %v858 = vld [vmem:[#allocation8 + $0xb0] sm:$0xff]
        %v859 = vld [vmem:[#allocation8 + $0xb8] sm:$0xff]
        %v860 = vld [vmem:[#allocation8 + $0xc0] sm:$0xff]
        %v861 = vld [vmem:[#allocation8 + $0xc8] sm:$0xff]
        %v862 = vld [vmem:[#allocation8 + $0xd0] sm:$0xff]
        %v863 = vld [vmem:[#allocation8 + $0xd8] sm:$0xff]
        %v864 = vld [vmem:[#allocation8 + $0xe0] sm:$0xff]
        %v865 = vld [vmem:[#allocation8 + $0xe8] sm:$0xff]
        %v866 = vld [vmem:[#allocation8 + $0xf0] sm:$0xff]
        %v867 = vld [vmem:[#allocation8 + $0xf8] sm:$0xff]
        %v868 = vld [vmem:[#allocation8 + $0x100] sm:$0xff]
        %v869 = vld [vmem:[#allocation8 + $0x108] sm:$0xff]
        %v870 = vld [vmem:[#allocation8 + $0x110] sm:$0xff]
        %v871 = vld [vmem:[#allocation8 + $0x118] sm:$0xff]
        %v872 = vld [vmem:[#allocation8 + $0x120] sm:$0xff]
        %v873 = vld [vmem:[#allocation8 + $0x128] sm:$0xff]
        %v874 = vld [vmem:[#allocation8 + $0x130] sm:$0xff]
        %v875 = vld [vmem:[#allocation8 + $0x138] sm:$0xff]
        %v876 = vld [vmem:[#allocation8 + $0x140] sm:$0xff]
        %v877 = vld [vmem:[#allocation8 + $0x148] sm:$0xff]
        %v878 = vld [vmem:[#allocation8 + $0x150] sm:$0xff]
        %v879 = vld [vmem:[#allocation8 + $0x158] sm:$0xff]
        %v880 = vld [vmem:[#allocation8 + $0x160] sm:$0xff]
        %v881 = vld [vmem:[#allocation8 + $0x168] sm:$0xff]
        %v882 = vld [vmem:[#allocation8 + $0x170] sm:$0xff]
        %v883 = vld [vmem:[#allocation8 + $0x178] sm:$0xff]
        %v884 = vld [vmem:[#allocation8 + $0x180] sm:$0xff]
        %v885 = vld [vmem:[#allocation8 + $0x188] sm:$0xff]
        %v886 = vld [vmem:[#allocation8 + $0x190] sm:$0xff]
        %v887 = vld [vmem:[#allocation8 + $0x198] sm:$0xff]
        %v888 = vld [vmem:[#allocation8 + $0x1a0] sm:$0xff]
        %v889 = vld [vmem:[#allocation8 + $0x1a8] sm:$0xff]
        %v890 = vld [vmem:[#allocation8 + $0x1b0] sm:$0xff]
        %v891 = vld [vmem:[#allocation8 + $0x1b8] sm:$0xff]
        %v892 = vld [vmem:[#allocation8 + $0x1c0] sm:$0xff]
        %v893 = vld [vmem:[#allocation8 + $0x1c8] sm:$0xff]
        %v894 = vld [vmem:[#allocation8 + $0x1d0] sm:$0xff]
        %v895 = vld [vmem:[#allocation8 + $0x1d8] sm:$0xff]
        %v896 = vld [vmem:[#allocation8 + $0x1e0] sm:$0xff]
        %v897 = vld [vmem:[#allocation8 + $0x1e8] sm:$0xff]
        %v898 = vld [vmem:[#allocation8 + $0x1f0] sm:$0xff]
        %v899 = vld [vmem:[#allocation8 + $0x1f8] sm:$0xff]
        %900 = vmatprep.subr.mxu0 0.0
        %901 = vmatpush1.msra.mxu0 %v836
        %902 = vmatprep.subr.mxu0 0.0
        %903 = vmatpush1.msra.mxu0 %v837
        %904 = vmatprep.subr.mxu0 0.0
        %905 = vmatpush1.msra.mxu0 %v838
        %906 = vmatprep.subr.mxu0 0.0
        %907 = vmatpush1.msra.mxu0 %v839
        %908 = vmatprep.subr.mxu0 0.0
        %909 = vmatpush1.msra.mxu0 %v840
        %910 = vmatprep.subr.mxu0 0.0
        %911 = vmatpush1.msra.mxu0 %v841
        %912 = vmatprep.subr.mxu0 0.0
        %913 = vmatpush1.msra.mxu0 %v842
        %914 = vmatprep.subr.mxu0 0.0
        %915 = vmatpush1.msra.mxu0 %v843
        %916 = vmatprep.subr.mxu0 0.0
        %917 = vmatpush1.msra.mxu0 %v844
        %918 = vmatprep.subr.mxu0 0.0
        %919 = vmatpush1.msra.mxu0 %v845
        %920 = vmatprep.subr.mxu0 0.0
        %921 = vmatpush1.msra.mxu0 %v846
        %922 = vmatprep.subr.mxu0 0.0
        %923 = vmatpush1.msra.mxu0 %v847
        %924 = vmatprep.subr.mxu0 0.0
        %925 = vmatpush1.msra.mxu0 %v848
        %926 = vmatprep.subr.mxu0 0.0
        %927 = vmatpush1.msra.mxu0 %v849
        %928 = vmatprep.subr.mxu0 0.0
        %929 = vmatpush1.msra.mxu0 %v850
        %930 = vmatprep.subr.mxu0 0.0
        %931 = vmatpush1.msra.mxu0 %v851
        %932 = vmatprep.subr.mxu0 0.0
        %933 = vmatpush1.msra.mxu0 %v852
        %934 = vmatprep.subr.mxu0 0.0
        %935 = vmatpush1.msra.mxu0 %v853
        %936 = vmatprep.subr.mxu0 0.0
        %937 = vmatpush1.msra.mxu0 %v854
        %938 = vmatprep.subr.mxu0 0.0
        %939 = vmatpush1.msra.mxu0 %v855
        %940 = vmatprep.subr.mxu0 0.0
        %941 = vmatpush1.msra.mxu0 %v856
        %942 = vmatprep.subr.mxu0 0.0
        %943 = vmatpush1.msra.mxu0 %v857
        %944 = vmatprep.subr.mxu0 0.0
        %945 = vmatpush1.msra.mxu0 %v858
        %946 = vmatprep.subr.mxu0 0.0
        %947 = vmatpush1.msra.mxu0 %v859
        %948 = vmatprep.subr.mxu0 0.0
        %949 = vmatpush1.msra.mxu0 %v860
        %950 = vmatprep.subr.mxu0 0.0
        %951 = vmatpush1.msra.mxu0 %v861
        %952 = vmatprep.subr.mxu0 0.0
        %953 = vmatpush1.msra.mxu0 %v862
        %954 = vmatprep.subr.mxu0 0.0
        %955 = vmatpush1.msra.mxu0 %v863
        %956 = vmatprep.subr.mxu0 0.0
        %957 = vmatpush1.msra.mxu0 %v864
        %958 = vmatprep.subr.mxu0 0.0
        %959 = vmatpush1.msra.mxu0 %v865
        %960 = vmatprep.subr.mxu0 0.0
        %961 = vmatpush1.msra.mxu0 %v866
        %962 = vmatprep.subr.mxu0 0.0
        %963 = vmatpush1.msra.mxu0 %v867
        %964 = vmatprep.mubr.f32.mxu0 %v473
        %965 = vmatmul.mubr.f32.gmra.mrb[0].mxu0 %v471
        %v966 = vpop.f32.mrb[0].mxu0
        %v967 = vadd.f32 0.0, %v966
        %v968 = vpop.f32.mrb[0].mxu0
        %969 = vmatprep.mubr.f32.mxu0 %v479
        %970 = vmatmul.mubr.f32.gmra.mrb[0].mxu0 %v477
        %v971 = vpop.f32.mrb[0].mxu0
        %v972 = vadd.f32 0.0, %v971
        %v973 = vpop.f32.mrb[0].mxu0
        %974 = vmatprep.mubr.f32.mxu0 %v485
        %975 = vmatmul.mubr.f32.gmra.mrb[0].mxu0 %v483
        %v976 = vpop.f32.mrb[0].mxu0
        %v977 = vadd.f32 0.0, %v976
        %v978 = vpop.f32.mrb[0].mxu0
        %979 = vmatprep.mubr.f32.mxu0 %v491
        %980 = vmatmul.mubr.f32.gmra.mrb[0].mxu0 %v489
        %v981 = vpop.f32.mrb[0].mxu0
        %v982 = vadd.f32 0.0, %v981
        %v983 = vpop.f32.mrb[0].mxu0
        %984 = vdwg.mxu0
        %985 = vmatprep.subr.mxu0 0.0
        %986 = vmatpush1.msra.mxu0 %v868
        %987 = vmatprep.subr.mxu0 0.0
        %988 = vmatpush1.msra.mxu0 %v869
        %989 = vmatprep.subr.mxu0 0.0
        %990 = vmatpush1.msra.mxu0 %v870
        %991 = vmatprep.subr.mxu0 0.0
        %992 = vmatpush1.msra.mxu0 %v871
        %993 = vmatprep.subr.mxu0 0.0
        %994 = vmatpush1.msra.mxu0 %v872
        %995 = vmatprep.subr.mxu0 0.0
        %996 = vmatpush1.msra.mxu0 %v873
        %997 = vmatprep.subr.mxu0 0.0
        %998 = vmatpush1.msra.mxu0 %v874
        %999 = vmatprep.subr.mxu0 0.0
        %1000 = vmatpush1.msra.mxu0 %v875
        %1001 = vmatprep.subr.mxu0 0.0
        %1002 = vmatpush1.msra.mxu0 %v876
        %1003 = vmatprep.subr.mxu0 0.0
        %1004 = vmatpush1.msra.mxu0 %v877
        %1005 = vmatprep.subr.mxu0 0.0
        %1006 = vmatpush1.msra.mxu0 %v878
        %1007 = vmatprep.subr.mxu0 0.0
        %1008 = vmatpush1.msra.mxu0 %v879
        %1009 = vmatprep.subr.mxu0 0.0
        %1010 = vmatpush1.msra.mxu0 %v880
        %1011 = vmatprep.subr.mxu0 0.0
        %1012 = vmatpush1.msra.mxu0 %v881
        %1013 = vmatprep.subr.mxu0 0.0
        %1014 = vmatpush1.msra.mxu0 %v882
        %1015 = vmatprep.subr.mxu0 0.0
        %1016 = vmatpush1.msra.mxu0 %v883
        %1017 = vmatprep.subr.mxu0 0.0
        %1018 = vmatpush1.msra.mxu0 %v884
        %1019 = vmatprep.subr.mxu0 0.0
        %1020 = vmatpush1.msra.mxu0 %v885
        %1021 = vmatprep.subr.mxu0 0.0
        %1022 = vmatpush1.msra.mxu0 %v886
        %1023 = vmatprep.subr.mxu0 0.0
        %1024 = vmatpush1.msra.mxu0 %v887
        %1025 = vmatprep.subr.mxu0 0.0
        %1026 = vmatpush1.msra.mxu0 %v888
        %1027 = vmatprep.subr.mxu0 0.0
        %1028 = vmatpush1.msra.mxu0 %v889
        %1029 = vmatprep.subr.mxu0 0.0
        %1030 = vmatpush1.msra.mxu0 %v890
        %1031 = vmatprep.subr.mxu0 0.0
        %1032 = vmatpush1.msra.mxu0 %v891
        %1033 = vmatprep.subr.mxu0 0.0
        %1034 = vmatpush1.msra.mxu0 %v892
        %1035 = vmatprep.subr.mxu0 0.0
        %1036 = vmatpush1.msra.mxu0 %v893
        %1037 = vmatprep.subr.mxu0 0.0
        %1038 = vmatpush1.msra.mxu0 %v894
        %1039 = vmatprep.subr.mxu0 0.0
        %1040 = vmatpush1.msra.mxu0 %v895
        %1041 = vmatprep.subr.mxu0 0.0
        %1042 = vmatpush1.msra.mxu0 %v896
        %1043 = vmatprep.subr.mxu0 0.0
        %1044 = vmatpush1.msra.mxu0 %v897
        %1045 = vmatprep.subr.mxu0 0.0
        %1046 = vmatpush1.msra.mxu0 %v898
        %1047 = vmatprep.subr.mxu0 0.0
        %1048 = vmatpush1.msra.mxu0 %v899
        %1049 = vmatprep.mubr.f32.mxu0 %v562
        %1050 = vmatmul.mubr.f32.gmra.mrb[0].mxu0 %v560
        %v1051 = vpop.f32.mrb[0].mxu0
        %v1052 = vadd.f32 %v967, %v1051
        %v1053 = vpop.f32.mrb[0].mxu0
        %1054 = vmatprep.mubr.f32.mxu0 %v568
        %1055 = vmatmul.mubr.f32.gmra.mrb[0].mxu0 %v566
        %v1056 = vpop.f32.mrb[0].mxu0
        %v1057 = vadd.f32 %v972, %v1056
        %v1058 = vpop.f32.mrb[0].mxu0
        %1059 = vmatprep.mubr.f32.mxu0 %v574
        %1060 = vmatmul.mubr.f32.gmra.mrb[0].mxu0 %v572
        %v1061 = vpop.f32.mrb[0].mxu0
        %v1062 = vadd.f32 %v977, %v1061
        %v1063 = vpop.f32.mrb[0].mxu0
        %1064 = vmatprep.mubr.f32.mxu0 %v580
        %1065 = vmatmul.mubr.f32.gmra.mrb[0].mxu0 %v578
        %v1066 = vpop.f32.mrb[0].mxu0
        %v1067 = vadd.f32 %v982, %v1066
        %v1068 = vpop.f32.mrb[0].mxu0
        %1069 = vdwg.mxu0
        %1070 = vst [vmem:[%s331] sm:$0xff] %v1052
        %1071 = vst [vmem:[%s331 + $0x8] sm:$0xff] %v1057
        %1072 = vst [vmem:[%s331 + $0x10] sm:$0xff] %v1062
        %1073 = vst [vmem:[%s331 + $0x18] sm:$0xff] %v1067
        %s1074 = sand.u32 %s126, 1
        %s1075 = scalar_lea.sflag [#allocation4], %s1074
        %s1076 = sand.u32 %s126, 1
        %s1077 = smul.addr %s1076, 128
        %s1078 = scalar_lea.vmem [#allocation10], %s1077
        %s1079 = sand.u32 %s29, 1
        %s1080 = scalar_lea.sflag [#allocation12], %s1079
        %s1081 = sand.u32 %s152, 1
        %s1082 = smul.addr %s1081, 32
        %s1083 = scalar_lea.vmem [#allocation11], %s1082
        %s1084 = sand.u32 %s29, 1
        %s1085 = scalar_lea.sflag [#allocation12], %s1084
        %s1086 = sand.u32 %s178, 1
        %s1087 = smul.addr %s1086, 32
        %s1088 = scalar_lea.vmem [#allocation13], %s1087
        // Predicated region
        $region53: #{tpu_custom_call.1} parent=35 // pred_check
          %p1089 = pneg %p136
        $region54: #{tpu_custom_call.1} parent=35 // pred_check_branch
          %1091 = sbr.rel (%p1089) target = $region56
        $region55: #{tpu_custom_call.1} parent=35 // pred_region
          %s1092 = smul.u32 4, %s29
          %s1094 = ssub.s32 2048, 2048
          %1095 = vsyncadd %s1075, %s1094
          %s1096 = smul.addr %s1092, 4
          %s1097 = smul.addr %s1096, 128
          %s1098 = scalar_lea.hbm %s4, %s1097
          %s1099 = sshll.u32 %s1078, 4
          %s1100 = int_to_ptr.vmem [resolvable:$true] %s1099
          %1105 = dma.vmem_to_hbm [thread:$0]  %s1100, 2048, %s1098, %s1075, 512, 512, 32
        $region56: #{tpu_custom_call.1} parent=35 // pred_fallthru
          _
        // Predicated region
        $region57: #{tpu_custom_call.1} parent=35 // pred_check
          %p1106 = pneg %p162
        $region58: #{tpu_custom_call.1} parent=35 // pred_check_branch
          %1108 = sbr.rel (%p1106) target = $region60
        $region59: #{tpu_custom_call.1} parent=35 // pred_region
          %s1109 = smul.u32 4, %s29
          %s1111 = ssub.s32 512, 512
          %1112 = vsyncadd %s1080, %s1111
          %s1113 = smul.addr %s1109, 128
          %s1114 = scalar_lea.hbm %s5, %s1113
          %s1115 = sshll.u32 %s1083, 4
          %s1116 = int_to_ptr.vmem [resolvable:$true] %s1115
          %1121 = dma.vmem_to_hbm [thread:$0]  %s1116, 512, %s1114, %s1080, 128, 128, 8
        $region60: #{tpu_custom_call.1} parent=35 // pred_fallthru
          _
        // Predicated region
        $region61: #{tpu_custom_call.1} parent=35 // pred_check
          %p1122 = pneg %p188
        $region62: #{tpu_custom_call.1} parent=35 // pred_check_branch
          %1124 = sbr.rel (%p1122) target = $region64
        $region63: #{tpu_custom_call.1} parent=35 // pred_region
          %s1125 = smul.u32 4, %s29
          %s1127 = ssub.s32 512, 512
          %1128 = vsyncadd %s1085, %s1127
          %s1129 = smul.addr %s1125, 128
          %s1130 = scalar_lea.hbm %s6, %s1129
          %s1131 = sshll.u32 %s1088, 4
          %s1132 = int_to_ptr.vmem [resolvable:$true] %s1131
          %1137 = dma.vmem_to_hbm [thread:$0]  %s1132, 512, %s1130, %s1085, 128, 128, 8
        $region64: #{tpu_custom_call.1} parent=35 // pred_fallthru
          _
      $region36: #{tpu_custom_call.1} parent=5 // pred_fallthru
        _
      %p1138 = scmp.le.s32.totalorder 2, %s24
      // Predicated region
      $region65: #{tpu_custom_call.1} parent=5 // pred_check
        %p1139 = pneg %p1138
      $region66: #{tpu_custom_call.1} parent=5 // pred_check_branch
        %1141 = sbr.rel (%p1139) target = $region68
      $region67: #{tpu_custom_call.1} parent=5 // pred_region
        %s1142 = ssub.s32 %s24, 2
        // Predicated region
        $region69: #{tpu_custom_call.1} parent=67 // pred_check
          %p1143 = pneg %p142
        $region70: #{tpu_custom_call.1} parent=67 // pred_check_branch
          %1145 = sbr.rel (%p1143) target = $region72
        $region71: #{tpu_custom_call.1} parent=67 // pred_region
          %s1146 = sand.u32 %s127, 1
          %s1147 = scalar_lea.sflag [#allocation4], %s1146
          %s1148 = sand.u32 %s127, 1
          %s1149 = smul.addr %s1148, 128
          %s1150 = scalar_lea.vmem [#allocation10], %s1149
          %1151 = dma.done %s1147, 2048
        $region72: #{tpu_custom_call.1} parent=67 // pred_fallthru
          _
        // Predicated region
        $region73: #{tpu_custom_call.1} parent=67 // pred_check
          %p1152 = pneg %p168
        $region74: #{tpu_custom_call.1} parent=67 // pred_check_branch
          %1154 = sbr.rel (%p1152) target = $region76
        $region75: #{tpu_custom_call.1} parent=67 // pred_region
          %s1155 = sand.u32 %s30, 1
          %s1156 = scalar_lea.sflag [#allocation12], %s1155
          %s1157 = sand.u32 %s153, 1
          %s1158 = smul.addr %s1157, 32
          %s1159 = scalar_lea.vmem [#allocation11], %s1158
          %1160 = dma.done %s1156, 512
        $region76: #{tpu_custom_call.1} parent=67 // pred_fallthru
          _
        // Predicated region
        $region77: #{tpu_custom_call.1} parent=67 // pred_check
          %p1161 = pneg %p194
        $region78: #{tpu_custom_call.1} parent=67 // pred_check_branch
          %1163 = sbr.rel (%p1161) target = $region80
        $region79: #{tpu_custom_call.1} parent=67 // pred_region
          %s1164 = sand.u32 %s30, 1
          %s1165 = scalar_lea.sflag [#allocation12], %s1164
          %s1166 = sand.u32 %s179, 1
          %s1167 = smul.addr %s1166, 32
          %s1168 = scalar_lea.vmem [#allocation13], %s1167
          %1169 = dma.done %s1165, 512
        $region80: #{tpu_custom_call.1} parent=67 // pred_fallthru
          _
      $region68: #{tpu_custom_call.1} parent=5 // pred_fallthru
        _
    $region6: #{tpu_custom_call.1} parent=1 // loop_footer
      %s28 = sadd.s32 1, %s24
    $region7: #{tpu_custom_call.1} parent=1 // loop_footer_branch
      %23 = sbr.rel target = $region3
    $region8: #{tpu_custom_call.1} parent=1 // loop_exit
      _
    %1170 = vsyncpa [#allocation3], 1
    %s1171 = scalar_lea.sflag [#allocation3], 1
    %1172 = vsyncpa %s1171, 1
    %1173 = vsyncpa [#allocation6], 1
    %1174 = vsyncpa [#allocation9], 1
    %1175 = vsyncpa [#allocation4], 1
    %s1176 = scalar_lea.sflag [#allocation4], 1
    %1177 = vsyncpa %s1176, 1
    %1178 = vsyncpa [#allocation12], 1
    %s1179 = scalar_lea.sflag [#allocation12], 1
    %1180 = vsyncpa %s1179, 1

</llo_original>
